<compile_context>
chip_gen: v5e
topology: v5e:2x2
jax: 0.10.0
libtpu: 0.0.40
codegen_flags: <defaults>
</compile_context>

<pallas_src>
import math

import jax
import jax.numpy as jnp
from jax.experimental import pallas as pl
from jax.experimental.pallas import tpu as pltpu

# ----------------------------- "config" ------------------------------------
IN_CHANNELS = 4          # C
POOLER_RESOLUTION = 4    # P
SAMPLING_RATIO = 2
IMG_SIZE = 64            # square images
FEAT_SIZE = 16           # H = W of the feature map
SPATIAL_SCALE = FEAT_SIZE / IMG_SIZE
REPRESENTATION_SIZE = 32 # MLP hidden size (fc6/fc7 out)
NUM_CLASSES = 4 + 1      # MINIBOOTSTRAP.DETECTOR.NUM_CLASSES + 1 (background)
SCORE_THRESH = 0.05
NMS_THRESH = 0.5
DETECTIONS_PER_IMG = 100
BBOX_REG_WEIGHTS = (10.0, 10.0, 5.0, 5.0)

# ---- lane-padded kernel dimensions -----------------------------------------
D_IN = IN_CHANNELS * POOLER_RESOLUTION * POOLER_RESOLUTION   # 64
D_PAD = 128                                                  # padded K of fc6
REP_PAD = 128                                                # padded hidden
FUSED_OUT = NUM_CLASSES + 4 * NUM_CLASSES                    # 25 (cls | bbox)
OUT_PAD = 128                                                # padded output lanes


# ----------------------- Pallas kernel: fused MLP head ----------------------
def _box_head_mlp_kernel(x_ref, w6_ref, b6_ref, w7_ref, b7_ref,
                         wcb_ref, bcb_ref, out_ref):
    """fc6 -> ReLU -> fc7 -> ReLU -> fused [cls_score | bbox_pred] slab.

    All matmul operands are bf16 (MXU native), accumulation and the
    bias/ReLU elementwise work are f32.
    """
    x = x_ref[...]                                                   # bf16
    h6 = jnp.dot(x, w6_ref[...], preferred_element_type=jnp.float32) + b6_ref[...]
    h6 = jnp.maximum(h6, 0.0).astype(jnp.bfloat16)
    h7 = jnp.dot(h6, w7_ref[...], preferred_element_type=jnp.float32) + b7_ref[...]
    h7 = jnp.maximum(h7, 0.0).astype(jnp.bfloat16)
    out = jnp.dot(h7, wcb_ref[...], preferred_element_type=jnp.float32) + bcb_ref[...]
    out_ref[...] = out                                               # f32, 128 lanes


def pack_mlp_params(params):
    """Zero-pad to lane-dense shapes, fuse the two predictor heads, cast bf16."""
    def pad2(a, rows, cols):
        return jnp.pad(a, ((0, rows - a.shape[0]), (0, cols - a.shape[1])))

    wcb = jnp.concatenate([params["wc"], params["wb"]], axis=1)      # (rep, 25)
    bcb = jnp.concatenate([params["bc"], params["bb"]], axis=1)      # (1, 25)
    return {
        "w6":  pad2(params["w6"], D_PAD, REP_PAD).astype(jnp.bfloat16),
        "b6":  pad2(params["b6"], 1, REP_PAD).astype(jnp.float32),
        "w7":  pad2(params["w7"], REP_PAD, REP_PAD).astype(jnp.bfloat16),
        "b7":  pad2(params["b7"], 1, REP_PAD).astype(jnp.float32),
        "wcb": pad2(wcb, REP_PAD, OUT_PAD).astype(jnp.bfloat16),
        "bcb": pad2(bcb, 1, OUT_PAD).astype(jnp.float32),
    }


def box_head_mlp(pooled_flat, packed, *, block_r=128):
    """pooled_flat: (R, D_IN) f32 -> (class_logits (R, NC), box_regression (R, 4*NC))."""
    R, d_in = pooled_flat.shape
    R_pad = pl.cdiv(R, block_r) * block_r

    # Pad rows up to a block multiple and the feature dim to 128 lanes; cast bf16.
    x = jnp.pad(pooled_flat, ((0, R_pad - R), (0, D_PAD - d_in))).astype(jnp.bfloat16)

    grid = (R_pad // block_r,)
    row_map = lambda i: (i, 0)
    const_map = lambda i: (0, 0)

    in_specs = [
        pl.BlockSpec((block_r, D_PAD), row_map),       # x
        pl.BlockSpec((D_PAD, REP_PAD), const_map),     # w6
        pl.BlockSpec((1, REP_PAD), const_map),         # b6
        pl.BlockSpec((REP_PAD, REP_PAD), const_map),   # w7
        pl.BlockSpec((1, REP_PAD), const_map),         # b7
        pl.BlockSpec((REP_PAD, OUT_PAD), const_map),   # wcb (fused cls|bbox)
        pl.BlockSpec((1, OUT_PAD), const_map),         # bcb
    ]
    out_specs = pl.BlockSpec((block_r, OUT_PAD), row_map)
    out_shape = jax.ShapeDtypeStruct((R_pad, OUT_PAD), jnp.float32)

    flops = 2 * R_pad * (D_PAD * REP_PAD + REP_PAD * REP_PAD + REP_PAD * OUT_PAD)
    bytes_accessed = (R_pad * D_PAD * 2
                      + (D_PAD * REP_PAD + REP_PAD * REP_PAD + REP_PAD * OUT_PAD) * 2
                      + (2 * REP_PAD + OUT_PAD) * 4
                      + R_pad * OUT_PAD * 4)

    out = pl.pallas_call(
        _box_head_mlp_kernel,
        grid=grid,
        in_specs=in_specs,
        out_specs=out_specs,
        out_shape=out_shape,
        compiler_params=pltpu.CompilerParams(
            dimension_semantics=("parallel",)),
        cost_estimate=pl.CostEstimate(
            flops=flops, transcendentals=0, bytes_accessed=bytes_accessed),
    )(x, packed["w6"], packed["b6"], packed["w7"], packed["b7"],
      packed["wcb"], packed["bcb"])

    class_logits = out[:R, :NUM_CLASSES]
    box_regression = out[:R, NUM_CLASSES:NUM_CLASSES + 4 * NUM_CLASSES]
    return class_logits, box_regression


# -------------------- ROIAlign pooling (dense-matmul form) -------------------
# Bilinear ROIAlign expressed as separable one-hot interpolation matmuls so
# there are no vmapped advanced-index gathers (MXU/VPU do all the work).
def _axis_interp_weights(start, roi_extent, length, out_size, sampling_ratio):
    """Per-axis pooled interpolation weights: (out_size, length)."""
    s = sampling_ratio
    bin_size = roi_extent / out_size
    idx = jnp.arange(out_size * s)
    bin_idx = (idx // s).astype(jnp.float32)
    sub_idx = (idx % s).astype(jnp.float32)
    coord = start + bin_idx * bin_size + (sub_idx + 0.5) * bin_size / s   # (P*s,)

    # torchvision semantics: samples outside [-1, length] contribute zero.
    valid = ((coord >= -1.0) & (coord <= float(length))).astype(jnp.float32)

    c = jnp.maximum(coord, 0.0)
    low = jnp.minimum(jnp.floor(c), length - 1.0)
    high = jnp.minimum(low + 1.0, length - 1.0)
    lerp = c - low
    hold = 1.0 - lerp

    grid = jnp.arange(length, dtype=jnp.float32)                          # (length,)
    w = (hold[:, None] * (grid[None, :] == low[:, None]).astype(jnp.float32)
         + lerp[:, None] * (grid[None, :] == high[:, None]).astype(jnp.float32))
    w = w * valid[:, None]
    # average the `s` sub-samples inside each output bin
    return w.reshape(out_size, s, length).mean(axis=1)                    # (P, length)


def roi_align(features, rois, *, out_size, spatial_scale, sampling_ratio):
    """features: (N, C, H, W) f32; rois: (R, 5) [batch_idx, x1, y1, x2, y2].
    Returns (R, C, out_size, out_size)."""
    N, C, H, W = features.shape

    def one_roi(roi):
        x1 = roi[1] * spatial_scale
        y1 = roi[2] * spatial_scale
        x2 = roi[3] * spatial_scale
        y2 = roi[4] * spatial_scale
        roi_w = jnp.maximum(x2 - x1, 1.0)
        roi_h = jnp.maximum(y2 - y1, 1.0)
        wy = _axis_interp_weights(y1, roi_h, H, out_size, sampling_ratio)  # (P, H)
        wx = _axis_interp_weights(x1, roi_w, W, out_size, sampling_ratio)  # (P, W)
        b_onehot = (jnp.arange(N, dtype=jnp.float32) == roi[0]).astype(jnp.float32)
        return b_onehot, wy, wx

    b_oh, wy, wx = jax.vmap(one_roi)(rois)          # (R,N), (R,P,H), (R,P,W)
    sel = jnp.einsum('rn,nchw->rchw', b_oh, features)
    tmp = jnp.einsum('rph,rchw->rcpw', wy, sel)
    pooled = jnp.einsum('rqw,rcpw->rcpq', wx, tmp)  # (R, C, P, P)
    return pooled


# ----------------- post-processing math (plain JAX glue) --------------------
def decode_boxes(deltas, boxes, weights=BBOX_REG_WEIGHTS):
    """deltas: (R, 4*NC); boxes: (R, 4) xyxy. Returns (R, NC, 4) decoded boxes."""
    R = deltas.shape[0]
    d = deltas.reshape(R, -1, 4)                    # (R, NC, 4) contiguous last axis
    to_remove = 1.0
    widths = boxes[:, 2] - boxes[:, 0] + to_remove
    heights = boxes[:, 3] - boxes[:, 1] + to_remove
    ctr_x = boxes[:, 0] + 0.5 * widths
    ctr_y = boxes[:, 1] + 0.5 * heights

    wx, wy, ww, wh = weights
    clip = math.log(1000.0 / 16)
    dx = d[..., 0] / wx
    dy = d[..., 1] / wy
    dw = jnp.minimum(d[..., 2] / ww, clip)
    dh = jnp.minimum(d[..., 3] / wh, clip)

    pred_ctr_x = dx * widths[:, None] + ctr_x[:, None]
    pred_ctr_y = dy * heights[:, None] + ctr_y[:, None]
    pred_w = jnp.exp(dw) * widths[:, None]
    pred_h = jnp.exp(dh) * heights[:, None]

    x1p = pred_ctr_x - 0.5 * pred_w
    y1p = pred_ctr_y - 0.5 * pred_h
    x2p = pred_ctr_x + 0.5 * pred_w - 1.0
    y2p = pred_ctr_y + 0.5 * pred_h - 1.0
    return jnp.stack([x1p, y1p, x2p, y2p], axis=-1)  # (R, NC, 4)


def clip_to_image(boxes, img_size):
    # square image: x and y share the same clip range; lane-dense elementwise clip
    return jnp.clip(boxes, 0.0, img_size - 1.0)


# ----------------------------- ROIBoxHead ----------------------------------
def init_params(key):
    ks = jax.random.split(key, 4)
    return {
        # stored as (in, out) so the kernel does x @ W (equivalent to torch Linear)
        "w6": 0.01 * jax.random.normal(ks[0], (D_IN, REPRESENTATION_SIZE), jnp.float32),
        "b6": jnp.zeros((1, REPRESENTATION_SIZE), jnp.float32),
        "w7": 0.01 * jax.random.normal(ks[1], (REPRESENTATION_SIZE, REPRESENTATION_SIZE), jnp.float32),
        "b7": jnp.zeros((1, REPRESENTATION_SIZE), jnp.float32),
        "wc": 0.01 * jax.random.normal(ks[2], (REPRESENTATION_SIZE, NUM_CLASSES), jnp.float32),
        "bc": jnp.zeros((1, NUM_CLASSES), jnp.float32),
        "wb": 0.001 * jax.random.normal(ks[3], (REPRESENTATION_SIZE, 4 * NUM_CLASSES), jnp.float32),
        "bb": jnp.zeros((1, 4 * NUM_CLASSES), jnp.float32),
    }


def roi_box_head_forward(features, rois, params):
    """ROIBoxHead.forward (inference branch).

    features: (N, C, H, W) f32 (NCHW, like PyTorch)
    rois:     (R, 5) f32, [batch_idx, x1, y1, x2, y2] in image coordinates
    Returns (features, result_dict, losses_dict) mirroring the PyTorch module.
    """
    # --- feature_extractor: ROIAlign pool + flatten + (fc6, fc7 fused in kernel)
    pooled = roi_align(features, rois,
                       out_size=POOLER_RESOLUTION,
                       spatial_scale=SPATIAL_SCALE,
                       sampling_ratio=SAMPLING_RATIO)            # (R, C, P, P)
    pooled_flat = pooled.reshape(pooled.shape[0], -1)            # (R, C*P*P)

    # --- predictor (and fc6/fc7) : Pallas fused MLP kernel
    packed = pack_mlp_params(params)
    class_logits, box_regression = box_head_mlp(pooled_flat, packed)

    # --- post_processor (softmax + box decode + clip).
    class_prob = jax.nn.softmax(class_logits, axis=-1)           # (R, NC)
    decoded = decode_boxes(box_regression, rois[:, 1:5])         # (R, NC, 4)
    decoded = clip_to_image(decoded, IMG_SIZE)
    # foreground classes only (column 0 is background)
    keep = class_prob[:, 1:] > SCORE_THRESH                      # (R, NC-1)
    # TODO(synk): per-class NMS + top-k (detections_per_img) have no clean
    # Pallas equivalent (data-dependent, variable-length output); omitted.
    result = {
        "scores": class_prob,
        "boxes": decoded,
        "keep_mask": keep,
    }
    return features, result, {}


# --------------------------------- main -------------------------------------
if __name__ == "__main__":
    key = jax.random.PRNGKey(0)
    k_feat, k_box, k_param = jax.random.split(key, 3)

    N = 2                       # images
    ROIS_PER_IMG = 8
    R = N * ROIS_PER_IMG        # total proposals

    features = jax.random.normal(k_feat, (N, IN_CHANNELS, FEAT_SIZE, FEAT_SIZE),
                                 jnp.float32)

    # deterministic random proposals (x1 < x2, y1 < y2) in image coordinates
    kb1, kb2 = jax.random.split(k_box)
    xy1 = jax.random.uniform(kb1, (R, 2), minval=0.0, maxval=IMG_SIZE * 0.5)
    wh = jax.random.uniform(kb2, (R, 2), minval=8.0, maxval=IMG_SIZE * 0.45)
    xy2 = jnp.minimum(xy1 + wh, IMG_SIZE - 1.0)
    batch_idx = jnp.repeat(jnp.arange(N, dtype=jnp.float32), ROIS_PER_IMG)[:, None]
    rois = jnp.concatenate([batch_idx, xy1, xy2], axis=1)        # (R, 5)

    params = init_params(k_param)

    fwd = jax.jit(roi_box_head_forward)
    feats_out, result, losses = fwd(features, rois, params)
    jax.block_until_ready(result["scores"])
    jax.block_until_ready(result["boxes"])

    assert result["scores"].shape == (R, NUM_CLASSES)
    assert result["boxes"].shape == (R, NUM_CLASSES, 4)
    assert result["keep_mask"].shape == (R, NUM_CLASSES - 1)
    assert bool(jnp.all(jnp.isfinite(result["scores"])))
    assert bool(jnp.all(jnp.isfinite(result["boxes"])))
    print("KERNEL_OK")
</pallas_src>

<mosaic_0001>
module attributes {stable_mosaic.version = 11 : i64} {
  func.func @_box_head_mlp_kernel(%arg0: i32, %arg1: memref<128x128xbf16, #tpu.memory_space<vmem>>, %arg2: memref<128x128xbf16, #tpu.memory_space<vmem>>, %arg3: memref<1x128xf32, #tpu.memory_space<vmem>>, %arg4: memref<128x128xbf16, #tpu.memory_space<vmem>>, %arg5: memref<1x128xf32, #tpu.memory_space<vmem>>, %arg6: memref<128x128xbf16, #tpu.memory_space<vmem>>, %arg7: memref<1x128xf32, #tpu.memory_space<vmem>>, %arg8: memref<128x128xf32, #tpu.memory_space<vmem>>) attributes {dimension_semantics = [#tpu.dimension_semantics<parallel>], iteration_bounds = array<i64: 1>, scalar_prefetch = 0 : i64, scratch_operands = 0 : i64, tpu.core_type = #tpu.core_type<tc>, window_params = [{transform_indices = @transform_0, window_bounds = array<i64: 128, 128>}, {pipeline_mode = #tpu.pipeline_mode<synchronous>, transform_indices = @transform_1, window_bounds = array<i64: 128, 128>}, {pipeline_mode = #tpu.pipeline_mode<synchronous>, transform_indices = @transform_2, window_bounds = array<i64: 1, 128>}, {pipeline_mode = #tpu.pipeline_mode<synchronous>, transform_indices = @transform_3, window_bounds = array<i64: 128, 128>}, {pipeline_mode = #tpu.pipeline_mode<synchronous>, transform_indices = @transform_4, window_bounds = array<i64: 1, 128>}, {pipeline_mode = #tpu.pipeline_mode<synchronous>, transform_indices = @transform_5, window_bounds = array<i64: 128, 128>}, {pipeline_mode = #tpu.pipeline_mode<synchronous>, transform_indices = @transform_6, window_bounds = array<i64: 1, 128>}, {transform_indices = @transform_7, window_bounds = array<i64: 128, 128>}]} {
    %c0 = arith.constant 0 : index
    %c0_0 = arith.constant 0 : index
    %0 = vector.load %arg1[%c0, %c0_0] : memref<128x128xbf16, #tpu.memory_space<vmem>>, vector<128x128xbf16>
    %c0_1 = arith.constant 0 : index
    %c0_2 = arith.constant 0 : index
    %1 = vector.load %arg2[%c0_1, %c0_2] : memref<128x128xbf16, #tpu.memory_space<vmem>>, vector<128x128xbf16>
    %cst = arith.constant dense<0.000000e+00> : vector<128x128xf32>
    %2 = tpu.matmul %0, %1, %cst {dimension_numbers = #tpu.dot_dimension_numbers<[1], [0], [0], [1], [0, 0, 1, 1], [], []>} : vector<128x128xbf16>, vector<128x128xbf16>, vector<128x128xf32> -> vector<128x128xf32>
    %c0_3 = arith.constant 0 : index
    %c0_4 = arith.constant 0 : index
    %3 = vector.load %arg3[%c0_3, %c0_4] : memref<1x128xf32, #tpu.memory_space<vmem>>, vector<1x128xf32>
    %4 = vector.broadcast %3 : vector<1x128xf32> to vector<128x128xf32>
    %5 = arith.addf %2, %4 : vector<128x128xf32>
    %cst_5 = arith.constant 0.000000e+00 : f32
    %6 = vector.broadcast %cst_5 : f32 to vector<128x128xf32>
    %7 = arith.maximumf %5, %6 : vector<128x128xf32>
    %8 = arith.truncf %7 : vector<128x128xf32> to vector<128x128xbf16>
    %c0_6 = arith.constant 0 : index
    %c0_7 = arith.constant 0 : index
    %9 = vector.load %arg4[%c0_6, %c0_7] : memref<128x128xbf16, #tpu.memory_space<vmem>>, vector<128x128xbf16>
    %cst_8 = arith.constant dense<0.000000e+00> : vector<128x128xf32>
    %10 = tpu.matmul %8, %9, %cst_8 {dimension_numbers = #tpu.dot_dimension_numbers<[1], [0], [0], [1], [0, 0, 1, 1], [], []>} : vector<128x128xbf16>, vector<128x128xbf16>, vector<128x128xf32> -> vector<128x128xf32>
    %c0_9 = arith.constant 0 : index
    %c0_10 = arith.constant 0 : index
    %11 = vector.load %arg5[%c0_9, %c0_10] : memref<1x128xf32, #tpu.memory_space<vmem>>, vector<1x128xf32>
    %12 = vector.broadcast %11 : vector<1x128xf32> to vector<128x128xf32>
    %13 = arith.addf %10, %12 : vector<128x128xf32>
    %cst_11 = arith.constant 0.000000e+00 : f32
    %14 = vector.broadcast %cst_11 : f32 to vector<128x128xf32>
    %15 = arith.maximumf %13, %14 : vector<128x128xf32>
    %16 = arith.truncf %15 : vector<128x128xf32> to vector<128x128xbf16>
    %c0_12 = arith.constant 0 : index
    %c0_13 = arith.constant 0 : index
    %17 = vector.load %arg6[%c0_12, %c0_13] : memref<128x128xbf16, #tpu.memory_space<vmem>>, vector<128x128xbf16>
    %cst_14 = arith.constant dense<0.000000e+00> : vector<128x128xf32>
    %18 = tpu.matmul %16, %17, %cst_14 {dimension_numbers = #tpu.dot_dimension_numbers<[1], [0], [0], [1], [0, 0, 1, 1], [], []>} : vector<128x128xbf16>, vector<128x128xbf16>, vector<128x128xf32> -> vector<128x128xf32>
    %c0_15 = arith.constant 0 : index
    %c0_16 = arith.constant 0 : index
    %19 = vector.load %arg7[%c0_15, %c0_16] : memref<1x128xf32, #tpu.memory_space<vmem>>, vector<1x128xf32>
    %20 = vector.broadcast %19 : vector<1x128xf32> to vector<128x128xf32>
    %21 = arith.addf %18, %20 : vector<128x128xf32>
    %c0_17 = arith.constant 0 : index
    %c0_18 = arith.constant 0 : index
    %22 = vector.load %arg8[%c0_17, %c0_18] : memref<128x128xf32, #tpu.memory_space<vmem>>, vector<128x128xf32>
    tpu.vector_store %arg8[%c0_17, %c0_18], %21 {strides = array<i32>} : memref<128x128xf32, #tpu.memory_space<vmem>>, vector<128x128xf32>,
    return
  }
  func.func @transform_0(%arg0: i32) -> (i32, i32) {
    %c0_i32 = arith.constant 0 : i32
    %c0_i32_0 = arith.constant 0 : i32
    return %arg0, %c0_i32 : i32, i32
  }
  func.func @transform_1(%arg0: i32) -> (i32, i32) {
    %c0_i32 = arith.constant 0 : i32
    %c0_i32_0 = arith.constant 0 : i32
    %c0_i32_1 = arith.constant 0 : i32
    return %c0_i32, %c0_i32_0 : i32, i32
  }
  func.func @transform_2(%arg0: i32) -> (i32, i32) {
    %c0_i32 = arith.constant 0 : i32
    %c0_i32_0 = arith.constant 0 : i32
    %c0_i32_1 = arith.constant 0 : i32
    return %c0_i32, %c0_i32_0 : i32, i32
  }
  func.func @transform_3(%arg0: i32) -> (i32, i32) {
    %c0_i32 = arith.constant 0 : i32
    %c0_i32_0 = arith.constant 0 : i32
    %c0_i32_1 = arith.constant 0 : i32
    return %c0_i32, %c0_i32_0 : i32, i32
  }
  func.func @transform_4(%arg0: i32) -> (i32, i32) {
    %c0_i32 = arith.constant 0 : i32
    %c0_i32_0 = arith.constant 0 : i32
    %c0_i32_1 = arith.constant 0 : i32
    return %c0_i32, %c0_i32_0 : i32, i32
  }
  func.func @transform_5(%arg0: i32) -> (i32, i32) {
    %c0_i32 = arith.constant 0 : i32
    %c0_i32_0 = arith.constant 0 : i32
    %c0_i32_1 = arith.constant 0 : i32
    return %c0_i32, %c0_i32_0 : i32, i32
  }
  func.func @transform_6(%arg0: i32) -> (i32, i32) {
    %c0_i32 = arith.constant 0 : i32
    %c0_i32_0 = arith.constant 0 : i32
    %c0_i32_1 = arith.constant 0 : i32
    return %c0_i32, %c0_i32_0 : i32, i32
  }
  func.func @transform_7(%arg0: i32) -> (i32, i32) {
    %c0_i32 = arith.constant 0 : i32
    %c0_i32_0 = arith.constant 0 : i32
    return %arg0, %c0_i32 : i32, i32
  }
}

</mosaic_0001>

<llo_original>
// kernel: roi_box_head_forward.1
$region0: #{roi_box_head_forward.1}
  #allocation0 [shape = 'u32[]', space=smem, size = 0x4, offset = 0x4, fixed_abs, tag = 'smem constant byte address 0x4 - core index']
  #allocation1 [shape = 'u32[72,128]{1,0:T(1,128)}', space=vmem, size = 0x9000, scoped, tag = 'internal scratch']
  %s0 = inlined_call_operand.vmem [shape: bf16[128,128], index: 0, kind: input, shape index: {}]
  %s1 = inlined_call_operand.vmem [shape: bf16[128,128], index: 1, kind: input, shape index: {}]
  %s2 = inlined_call_operand.vmem [shape: f32[1,128], index: 2, kind: input, shape index: {}]
  %s3 = inlined_call_operand.vmem [shape: bf16[128,128], index: 3, kind: input, shape index: {}]
  %s4 = inlined_call_operand.vmem [shape: f32[1,128], index: 4, kind: input, shape index: {}]
  %s5 = inlined_call_operand.vmem [shape: bf16[128,128], index: 5, kind: input, shape index: {}]
  %s6 = inlined_call_operand.vmem [shape: f32[1,128], index: 6, kind: input, shape index: {}]
  %s7 = inlined_call_operand.vmem [shape: f32[128,128], index: 7, kind: output, shape index: {}]
  %s8 = sld [smem:[#allocation0]]
  $region38: #{roi_box_head_forward.1} parent=0
    _
  %s10 = ssub.s32 1, %s8
  %s11 = scalar_select 0, %s10, %s8
  // Predicated region
  $region2: #{roi_box_head_forward.1} parent=0 // pred_check
    _
  $region3: #{roi_box_head_forward.1} parent=0 // pred_check_branch
    %13 = sbr.rel (0) target = $region5
  $region4: #{roi_box_head_forward.1} parent=0 // pred_region
    _
  $region5: #{roi_box_head_forward.1} parent=0 // pred_fallthru
    _
  // Predicated region
  $region6: #{roi_box_head_forward.1} parent=0 // pred_check
    _
  $region7: #{roi_box_head_forward.1} parent=0 // pred_check_branch
    %15 = sbr.rel (0) target = $region9
  $region8: #{roi_box_head_forward.1} parent=0 // pred_region
    _
  $region9: #{roi_box_head_forward.1} parent=0 // pred_fallthru
    _
  // Predicated region
  $region10: #{roi_box_head_forward.1} parent=0 // pred_check
    _
  $region11: #{roi_box_head_forward.1} parent=0 // pred_check_branch
    %17 = sbr.rel (0) target = $region13
  $region12: #{roi_box_head_forward.1} parent=0 // pred_region
    _
  $region13: #{roi_box_head_forward.1} parent=0 // pred_fallthru
    _
  // Predicated region
  $region14: #{roi_box_head_forward.1} parent=0 // pred_check
    _
  $region15: #{roi_box_head_forward.1} parent=0 // pred_check_branch
    %19 = sbr.rel (0) target = $region17
  $region16: #{roi_box_head_forward.1} parent=0 // pred_region
    _
  $region17: #{roi_box_head_forward.1} parent=0 // pred_fallthru
    _
  // Predicated region
  $region18: #{roi_box_head_forward.1} parent=0 // pred_check
    _
  $region19: #{roi_box_head_forward.1} parent=0 // pred_check_branch
    %21 = sbr.rel (0) target = $region21
  $region20: #{roi_box_head_forward.1} parent=0 // pred_region
    _
  $region21: #{roi_box_head_forward.1} parent=0 // pred_fallthru
    _
  // Predicated region
  $region22: #{roi_box_head_forward.1} parent=0 // pred_check
    _
  $region23: #{roi_box_head_forward.1} parent=0 // pred_check_branch
    %23 = sbr.rel (0) target = $region25
  $region24: #{roi_box_head_forward.1} parent=0 // pred_region
    _
  $region25: #{roi_box_head_forward.1} parent=0 // pred_fallthru
    _
  // Predicated region
  $region26: #{roi_box_head_forward.1} parent=0 // pred_check
    _
  $region27: #{roi_box_head_forward.1} parent=0 // pred_check_branch
    %25 = sbr.rel (0) target = $region29
  $region28: #{roi_box_head_forward.1} parent=0 // pred_region
    _
  $region29: #{roi_box_head_forward.1} parent=0 // pred_fallthru
    _
  %v26 = vld [vmem:[%s0] sm:$0xf]
  %v27 = vld [vmem:[%s0 + $0x4] sm:$0xf]
  %v28 = vld [vmem:[%s0 + $0x8] sm:$0xf]
  %v29 = vld [vmem:[%s0 + $0xc] sm:$0xf]
  %v30 = vld [vmem:[%s0 + $0x10] sm:$0xf]
  %v31 = vld [vmem:[%s0 + $0x14] sm:$0xf]
  %v32 = vld [vmem:[%s0 + $0x18] sm:$0xf]
  %v33 = vld [vmem:[%s0 + $0x1c] sm:$0xf]
  %v34 = vld [vmem:[%s0 + $0x20] sm:$0xf]
  %v35 = vld [vmem:[%s0 + $0x24] sm:$0xf]
  %v36 = vld [vmem:[%s0 + $0x28] sm:$0xf]
  %v37 = vld [vmem:[%s0 + $0x2c] sm:$0xf]
  %v38 = vld [vmem:[%s0 + $0x30] sm:$0xf]
  %v39 = vld [vmem:[%s0 + $0x34] sm:$0xf]
  %v40 = vld [vmem:[%s0 + $0x38] sm:$0xf]
  %v41 = vld [vmem:[%s0 + $0x3c] sm:$0xf]
  %v42 = vld [vmem:[%s1] sm:$0xf]
  %v43 = vld [vmem:[%s1 + $0x4] sm:$0xf]
  %v44 = vld [vmem:[%s1 + $0x8] sm:$0xf]
  %v45 = vld [vmem:[%s1 + $0xc] sm:$0xf]
  %v46 = vld [vmem:[%s1 + $0x10] sm:$0xf]
  %v47 = vld [vmem:[%s1 + $0x14] sm:$0xf]
  %v48 = vld [vmem:[%s1 + $0x18] sm:$0xf]
  %v49 = vld [vmem:[%s1 + $0x1c] sm:$0xf]
  %v50 = vld [vmem:[%s1 + $0x20] sm:$0xf]
  %v51 = vld [vmem:[%s1 + $0x24] sm:$0xf]
  %v52 = vld [vmem:[%s1 + $0x28] sm:$0xf]
  %v53 = vld [vmem:[%s1 + $0x2c] sm:$0xf]
  %v54 = vld [vmem:[%s1 + $0x30] sm:$0xf]
  %v55 = vld [vmem:[%s1 + $0x34] sm:$0xf]
  %v56 = vld [vmem:[%s1 + $0x38] sm:$0xf]
  %v57 = vld [vmem:[%s1 + $0x3c] sm:$0xf]
  %v58 = vld [vmem:[%s2] sm:$0x1]
  %v60 = vperm.slane %v58, 0
  %v78 = vunpack.c.l.b16 %v26
  %v79 = vunpack.c.l.b16 %v27
  %v80 = vunpack.c.l.b16 %v28
  %v81 = vunpack.c.l.b16 %v29
  %v82 = vunpack.c.l.b16 %v30
  %v83 = vunpack.c.l.b16 %v31
  %v84 = vunpack.c.l.b16 %v32
  %v85 = vunpack.c.l.b16 %v33
  %v86 = vunpack.c.l.b16 %v34
  %v87 = vunpack.c.l.b16 %v35
  %v88 = vunpack.c.l.b16 %v36
  %v89 = vunpack.c.l.b16 %v37
  %v90 = vunpack.c.l.b16 %v38
  %v91 = vunpack.c.l.b16 %v39
  %v92 = vunpack.c.l.b16 %v40
  %v93 = vunpack.c.l.b16 %v41
  %v94 = vpack.c.b16 %v79, %v78
  %v95 = vpack.c.b16 %v81, %v80
  %v96 = vpack.c.b16 %v83, %v82
  %v97 = vpack.c.b16 %v85, %v84
  %v98 = vpack.c.b16 %v87, %v86
  %v99 = vpack.c.b16 %v89, %v88
  %v100 = vpack.c.b16 %v91, %v90
  %v101 = vpack.c.b16 %v93, %v92
  %v126 = vunpack.c.l.b16 %v42
  %v127 = vunpack.c.l.b16 %v43
  %v128 = vunpack.c.l.b16 %v44
  %v129 = vunpack.c.l.b16 %v45
  %v130 = vunpack.c.l.b16 %v46
  %v131 = vunpack.c.l.b16 %v47
  %v132 = vunpack.c.l.b16 %v48
  %v133 = vunpack.c.l.b16 %v49
  %v134 = vunpack.c.l.b16 %v50
  %v135 = vunpack.c.l.b16 %v51
  %v136 = vunpack.c.l.b16 %v52
  %v137 = vunpack.c.l.b16 %v53
  %v138 = vunpack.c.l.b16 %v54
  %v139 = vunpack.c.l.b16 %v55
  %v140 = vunpack.c.l.b16 %v56
  %v141 = vunpack.c.l.b16 %v57
  %v142 = vpack.c.b16 %v127, %v126
  %v143 = vpack.c.b16 %v129, %v128
  %v144 = vpack.c.b16 %v131, %v130
  %v145 = vpack.c.b16 %v133, %v132
  %v146 = vpack.c.b16 %v135, %v134
  %v147 = vpack.c.b16 %v137, %v136
  %v148 = vpack.c.b16 %v139, %v138
  %v149 = vpack.c.b16 %v141, %v140
  %158 = vmatpush.bf16.msra.mxu0 %v149
  %159 = vmatpush.bf16.msra.mxu0 %v148
  %160 = vmatpush.bf16.msra.mxu0 %v147
  %161 = vmatpush.bf16.msra.mxu0 %v146
  %162 = vmatpush.bf16.msra.mxu0 %v145
  %163 = vmatpush.bf16.msra.mxu0 %v144
  %164 = vmatpush.bf16.msra.mxu0 %v143
  %165 = vmatpush.bf16.msra.mxu0 %v142
  %166 = vmatmul.bf16.gmra.mxu0 %v94
  %v167 = vpop.f32.mrf.mxu0
  %v168 = vadd.f32 %v60, %v167
  %v169 = vpop.f32.mrf.mxu0
  %v170 = vadd.f32 %v60, %v169
  %171 = vmatmul.bf16.gmra.mxu0 %v95
  %v172 = vpop.f32.mrf.mxu0
  %v173 = vadd.f32 %v60, %v172
  %v174 = vpop.f32.mrf.mxu0
  %v175 = vadd.f32 %v60, %v174
  %176 = vmatmul.bf16.gmra.mxu0 %v96
  %v177 = vpop.f32.mrf.mxu0
  %v178 = vadd.f32 %v60, %v177
  %v179 = vpop.f32.mrf.mxu0
  %v180 = vadd.f32 %v60, %v179
  %181 = vmatmul.bf16.gmra.mxu0 %v97
  %v182 = vpop.f32.mrf.mxu0
  %v183 = vadd.f32 %v60, %v182
  %v184 = vpop.f32.mrf.mxu0
  %v185 = vadd.f32 %v60, %v184
  %186 = vmatmul.bf16.gmra.mxu0 %v98
  %v187 = vpop.f32.mrf.mxu0
  %v188 = vadd.f32 %v60, %v187
  %v189 = vpop.f32.mrf.mxu0
  %v190 = vadd.f32 %v60, %v189
  %191 = vmatmul.bf16.gmra.mxu0 %v99
  %v192 = vpop.f32.mrf.mxu0
  %v193 = vadd.f32 %v60, %v192
  %v194 = vpop.f32.mrf.mxu0
  %v195 = vadd.f32 %v60, %v194
  %196 = vmatmul.bf16.gmra.mxu0 %v100
  %v197 = vpop.f32.mrf.mxu0
  %v198 = vadd.f32 %v60, %v197
  %v199 = vpop.f32.mrf.mxu0
  %v200 = vadd.f32 %v60, %v199
  %201 = vmatmul.bf16.gmra.mxu0 %v101
  %v202 = vpop.f32.mrf.mxu0
  %v203 = vadd.f32 %v60, %v202
  %v204 = vpop.f32.mrf.mxu0
  %v205 = vadd.f32 %v60, %v204
  %206 = vdwg.mxu0
  %v207 = vmax.f32 %v168, 0.0
  %v208 = vmax.f32 %v170, 0.0
  %v209 = vmax.f32 %v173, 0.0
  %v210 = vmax.f32 %v175, 0.0
  %v211 = vmax.f32 %v178, 0.0
  %v212 = vmax.f32 %v180, 0.0
  %v213 = vmax.f32 %v183, 0.0
  %v214 = vmax.f32 %v185, 0.0
  %v215 = vmax.f32 %v188, 0.0
  %v216 = vmax.f32 %v190, 0.0
  %v217 = vmax.f32 %v193, 0.0
  %v218 = vmax.f32 %v195, 0.0
  %v219 = vmax.f32 %v198, 0.0
  %v220 = vmax.f32 %v200, 0.0
  %v221 = vmax.f32 %v203, 0.0
  %v222 = vmax.f32 %v205, 0.0
  %v223 = vpack.c.bf16 %v208, %v207
  %v224 = vpack.c.bf16 %v210, %v209
  %v225 = vpack.c.bf16 %v212, %v211
  %v226 = vpack.c.bf16 %v214, %v213
  %v227 = vpack.c.bf16 %v216, %v215
  %v228 = vpack.c.bf16 %v218, %v217
  %v229 = vpack.c.bf16 %v220, %v219
  %v230 = vpack.c.bf16 %v222, %v221
  %v231 = vld [vmem:[%s3] sm:$0xf]
  %v232 = vld [vmem:[%s3 + $0x4] sm:$0xf]
  %v233 = vld [vmem:[%s3 + $0x8] sm:$0xf]
  %v234 = vld [vmem:[%s3 + $0xc] sm:$0xf]
  %v235 = vld [vmem:[%s3 + $0x10] sm:$0xf]
  %v236 = vld [vmem:[%s3 + $0x14] sm:$0xf]
  %v237 = vld [vmem:[%s3 + $0x18] sm:$0xf]
  %v238 = vld [vmem:[%s3 + $0x1c] sm:$0xf]
  %v239 = vld [vmem:[%s3 + $0x20] sm:$0xf]
  %v240 = vld [vmem:[%s3 + $0x24] sm:$0xf]
  %v241 = vld [vmem:[%s3 + $0x28] sm:$0xf]
  %v242 = vld [vmem:[%s3 + $0x2c] sm:$0xf]
  %v243 = vld [vmem:[%s3 + $0x30] sm:$0xf]
  %v244 = vld [vmem:[%s3 + $0x34] sm:$0xf]
  %v245 = vld [vmem:[%s3 + $0x38] sm:$0xf]
  %v246 = vld [vmem:[%s3 + $0x3c] sm:$0xf]
  %v247 = vld [vmem:[%s4] sm:$0x1]
  %v249 = vperm.slane %v247, 0
  %v267 = vunpack.c.l.b16 %v231
  %v268 = vunpack.c.l.b16 %v232
  %v269 = vunpack.c.l.b16 %v233
  %v270 = vunpack.c.l.b16 %v234
  %v271 = vunpack.c.l.b16 %v235
  %v272 = vunpack.c.l.b16 %v236
  %v273 = vunpack.c.l.b16 %v237
  %v274 = vunpack.c.l.b16 %v238
  %v275 = vunpack.c.l.b16 %v239
  %v276 = vunpack.c.l.b16 %v240
  %v277 = vunpack.c.l.b16 %v241
  %v278 = vunpack.c.l.b16 %v242
  %v279 = vunpack.c.l.b16 %v243
  %v280 = vunpack.c.l.b16 %v244
  %v281 = vunpack.c.l.b16 %v245
  %v282 = vunpack.c.l.b16 %v246
  %v283 = vpack.c.b16 %v268, %v267
  %v284 = vpack.c.b16 %v270, %v269
  %v285 = vpack.c.b16 %v272, %v271
  %v286 = vpack.c.b16 %v274, %v273
  %v287 = vpack.c.b16 %v276, %v275
  %v288 = vpack.c.b16 %v278, %v277
  %v289 = vpack.c.b16 %v280, %v279
  %v290 = vpack.c.b16 %v282, %v281
  %299 = vmatpush.bf16.msra.mxu0 %v290
  %300 = vmatpush.bf16.msra.mxu0 %v289
  %301 = vmatpush.bf16.msra.mxu0 %v288
  %302 = vmatpush.bf16.msra.mxu0 %v287
  %303 = vmatpush.bf16.msra.mxu0 %v286
  %304 = vmatpush.bf16.msra.mxu0 %v285
  %305 = vmatpush.bf16.msra.mxu0 %v284
  %306 = vmatpush.bf16.msra.mxu0 %v283
  %307 = vmatmul.bf16.gmra.mxu0 %v223
  %v308 = vpop.f32.mrf.mxu0
  %v309 = vadd.f32 %v249, %v308
  %v310 = vpop.f32.mrf.mxu0
  %v311 = vadd.f32 %v249, %v310
  %312 = vmatmul.bf16.gmra.mxu0 %v224
  %v313 = vpop.f32.mrf.mxu0
  %v314 = vadd.f32 %v249, %v313
  %v315 = vpop.f32.mrf.mxu0
  %v316 = vadd.f32 %v249, %v315
  %317 = vmatmul.bf16.gmra.mxu0 %v225
  %v318 = vpop.f32.mrf.mxu0
  %v319 = vadd.f32 %v249, %v318
  %v320 = vpop.f32.mrf.mxu0
  %v321 = vadd.f32 %v249, %v320
  %322 = vmatmul.bf16.gmra.mxu0 %v226
  %v323 = vpop.f32.mrf.mxu0
  %v324 = vadd.f32 %v249, %v323
  %v325 = vpop.f32.mrf.mxu0
  %v326 = vadd.f32 %v249, %v325
  %327 = vmatmul.bf16.gmra.mxu0 %v227
  %v328 = vpop.f32.mrf.mxu0
  %v329 = vadd.f32 %v249, %v328
  %v330 = vpop.f32.mrf.mxu0
  %v331 = vadd.f32 %v249, %v330
  %332 = vmatmul.bf16.gmra.mxu0 %v228
  %v333 = vpop.f32.mrf.mxu0
  %v334 = vadd.f32 %v249, %v333
  %v335 = vpop.f32.mrf.mxu0
  %v336 = vadd.f32 %v249, %v335
  %337 = vmatmul.bf16.gmra.mxu0 %v229
  %v338 = vpop.f32.mrf.mxu0
  %v339 = vadd.f32 %v249, %v338
  %v340 = vpop.f32.mrf.mxu0
  %v341 = vadd.f32 %v249, %v340
  %342 = vmatmul.bf16.gmra.mxu0 %v230
  %v343 = vpop.f32.mrf.mxu0
  %v344 = vadd.f32 %v249, %v343
  %v345 = vpop.f32.mrf.mxu0
  %v346 = vadd.f32 %v249, %v345
  %347 = vdwg.mxu0
  %v348 = vmax.f32 %v309, 0.0
  %v349 = vmax.f32 %v311, 0.0
  %v350 = vmax.f32 %v314, 0.0
  %v351 = vmax.f32 %v316, 0.0
  %v352 = vmax.f32 %v319, 0.0
  %v353 = vmax.f32 %v321, 0.0
  %v354 = vmax.f32 %v324, 0.0
  %v355 = vmax.f32 %v326, 0.0
  %v356 = vmax.f32 %v329, 0.0
  %v357 = vmax.f32 %v331, 0.0
  %v358 = vmax.f32 %v334, 0.0
  %v359 = vmax.f32 %v336, 0.0
  %v360 = vmax.f32 %v339, 0.0
  %v361 = vmax.f32 %v341, 0.0
  %v362 = vmax.f32 %v344, 0.0
  %v363 = vmax.f32 %v346, 0.0
  %v364 = vpack.c.bf16 %v349, %v348
  %v365 = vpack.c.bf16 %v351, %v350
  %v366 = vpack.c.bf16 %v353, %v352
  %v367 = vpack.c.bf16 %v355, %v354
  %v368 = vpack.c.bf16 %v357, %v356
  %v369 = vpack.c.bf16 %v359, %v358
  %v370 = vpack.c.bf16 %v361, %v360
  %v371 = vpack.c.bf16 %v363, %v362
  %v372 = vld [vmem:[%s5] sm:$0xf]
  %v373 = vld [vmem:[%s5 + $0x4] sm:$0xf]
  %v374 = vld [vmem:[%s5 + $0x8] sm:$0xf]
  %v375 = vld [vmem:[%s5 + $0xc] sm:$0xf]
  %v376 = vld [vmem:[%s5 + $0x10] sm:$0xf]
  %v377 = vld [vmem:[%s5 + $0x14] sm:$0xf]
  %v378 = vld [vmem:[%s5 + $0x18] sm:$0xf]
  %v379 = vld [vmem:[%s5 + $0x1c] sm:$0xf]
  %v380 = vld [vmem:[%s5 + $0x20] sm:$0xf]
  %v381 = vld [vmem:[%s5 + $0x24] sm:$0xf]
  %v382 = vld [vmem:[%s5 + $0x28] sm:$0xf]
  %v383 = vld [vmem:[%s5 + $0x2c] sm:$0xf]
  %v384 = vld [vmem:[%s5 + $0x30] sm:$0xf]
  %v385 = vld [vmem:[%s5 + $0x34] sm:$0xf]
  %v386 = vld [vmem:[%s5 + $0x38] sm:$0xf]
  %v387 = vld [vmem:[%s5 + $0x3c] sm:$0xf]
  %v388 = vld [vmem:[%s6] sm:$0x1]
  %v390 = vperm.slane %v388, 0
  %v408 = vunpack.c.l.b16 %v372
  %v409 = vunpack.c.l.b16 %v373
  %v410 = vunpack.c.l.b16 %v374
  %v411 = vunpack.c.l.b16 %v375
  %v412 = vunpack.c.l.b16 %v376
  %v413 = vunpack.c.l.b16 %v377
  %v414 = vunpack.c.l.b16 %v378
  %v415 = vunpack.c.l.b16 %v379
  %v416 = vunpack.c.l.b16 %v380
  %v417 = vunpack.c.l.b16 %v381
  %v418 = vunpack.c.l.b16 %v382
  %v419 = vunpack.c.l.b16 %v383
  %v420 = vunpack.c.l.b16 %v384
  %v421 = vunpack.c.l.b16 %v385
  %v422 = vunpack.c.l.b16 %v386
  %v423 = vunpack.c.l.b16 %v387
  %v424 = vpack.c.b16 %v409, %v408
  %v425 = vpack.c.b16 %v411, %v410
  %v426 = vpack.c.b16 %v413, %v412
  %v427 = vpack.c.b16 %v415, %v414
  %v428 = vpack.c.b16 %v417, %v416
  %v429 = vpack.c.b16 %v419, %v418
  %v430 = vpack.c.b16 %v421, %v420
  %v431 = vpack.c.b16 %v423, %v422
  %440 = vmatpush.bf16.msra.mxu0 %v431
  %441 = vmatpush.bf16.msra.mxu0 %v430
  %442 = vmatpush.bf16.msra.mxu0 %v429
  %443 = vmatpush.bf16.msra.mxu0 %v428
  %444 = vmatpush.bf16.msra.mxu0 %v427
  %445 = vmatpush.bf16.msra.mxu0 %v426
  %446 = vmatpush.bf16.msra.mxu0 %v425
  %447 = vmatpush.bf16.msra.mxu0 %v424
  %448 = vmatmul.bf16.gmra.mxu0 %v364
  %v449 = vpop.f32.mrf.mxu0
  %v450 = vadd.f32 %v390, %v449
  %v451 = vpop.f32.mrf.mxu0
  %v452 = vadd.f32 %v390, %v451
  %453 = vmatmul.bf16.gmra.mxu0 %v365
  %v454 = vpop.f32.mrf.mxu0
  %v455 = vadd.f32 %v390, %v454
  %v456 = vpop.f32.mrf.mxu0
  %v457 = vadd.f32 %v390, %v456
  %458 = vmatmul.bf16.gmra.mxu0 %v366
  %v459 = vpop.f32.mrf.mxu0
  %v460 = vadd.f32 %v390, %v459
  %v461 = vpop.f32.mrf.mxu0
  %v462 = vadd.f32 %v390, %v461
  %463 = vmatmul.bf16.gmra.mxu0 %v367
  %v464 = vpop.f32.mrf.mxu0
  %v465 = vadd.f32 %v390, %v464
  %v466 = vpop.f32.mrf.mxu0
  %v467 = vadd.f32 %v390, %v466
  %468 = vmatmul.bf16.gmra.mxu0 %v368
  %v469 = vpop.f32.mrf.mxu0
  %v470 = vadd.f32 %v390, %v469
  %v471 = vpop.f32.mrf.mxu0
  %v472 = vadd.f32 %v390, %v471
  %473 = vmatmul.bf16.gmra.mxu0 %v369
  %v474 = vpop.f32.mrf.mxu0
  %v475 = vadd.f32 %v390, %v474
  %v476 = vpop.f32.mrf.mxu0
  %v477 = vadd.f32 %v390, %v476
  %478 = vmatmul.bf16.gmra.mxu0 %v370
  %v479 = vpop.f32.mrf.mxu0
  %v480 = vadd.f32 %v390, %v479
  %v481 = vpop.f32.mrf.mxu0
  %v482 = vadd.f32 %v390, %v481
  %483 = vmatmul.bf16.gmra.mxu0 %v371
  %v484 = vpop.f32.mrf.mxu0
  %v485 = vadd.f32 %v390, %v484
  %v486 = vpop.f32.mrf.mxu0
  %v487 = vadd.f32 %v390, %v486
  %488 = vdwg.mxu0
  %489 = vst [vmem:[%s7] sm:$0xff] %v450
  %490 = vst [vmem:[%s7 + $0x8] sm:$0xff] %v452
  %491 = vst [vmem:[%s7 + $0x10] sm:$0xff] %v455
  %492 = vst [vmem:[%s7 + $0x18] sm:$0xff] %v457
  %493 = vst [vmem:[%s7 + $0x20] sm:$0xff] %v460
  %494 = vst [vmem:[%s7 + $0x28] sm:$0xff] %v462
  %495 = vst [vmem:[%s7 + $0x30] sm:$0xff] %v465
  %496 = vst [vmem:[%s7 + $0x38] sm:$0xff] %v467
  %497 = vst [vmem:[%s7 + $0x40] sm:$0xff] %v470
  %498 = vst [vmem:[%s7 + $0x48] sm:$0xff] %v472
  %499 = vst [vmem:[%s7 + $0x50] sm:$0xff] %v475
  %500 = vst [vmem:[%s7 + $0x58] sm:$0xff] %v477
  %501 = vst [vmem:[%s7 + $0x60] sm:$0xff] %v480
  %502 = vst [vmem:[%s7 + $0x68] sm:$0xff] %v482
  %503 = vst [vmem:[%s7 + $0x70] sm:$0xff] %v485
  %504 = vst [vmem:[%s7 + $0x78] sm:$0xff] %v487
  // Predicated region
  $region30: #{roi_box_head_forward.1} parent=0 // pred_check
    _
  $region31: #{roi_box_head_forward.1} parent=0 // pred_check_branch
    %506 = sbr.rel (0) target = $region33
  $region32: #{roi_box_head_forward.1} parent=0 // pred_region
    _
  $region33: #{roi_box_head_forward.1} parent=0 // pred_fallthru
    _
  // Predicated region
  $region34: #{roi_box_head_forward.1} parent=0 // pred_check
    _
  $region35: #{roi_box_head_forward.1} parent=0 // pred_check_branch
    %508 = sbr.rel (0) target = $region37
  $region36: #{roi_box_head_forward.1} parent=0 // pred_region
    _
  $region37: #{roi_box_head_forward.1} parent=0 // pred_fallthru
    _

</llo_original>
